<compile_context>
chip_gen: v7x
topology: tpu7x:2x2x1
jax: 0.10.0
libtpu: 0.0.40
codegen_flags: <defaults>
</compile_context>

<pallas_src>
import jax
import jax.numpy as jnp
from jax.experimental import pallas as pl
from jax.experimental.pallas import tpu as pltpu

IN_DIM = 2
HIDDEN = 100
HIDDEN_PAD = 104          # next multiple of 8 above 100 (sublane-aligned)
OUT_DIM = 5
OUT_PAD = 8               # full 8-sublane output rows -> unmasked stores
MAX_TILE_N = 2048         # batch tile on the lane dim


def _round_up(x, m):
    return ((x + m - 1) // m) * m


def _bf16_compute_default():
    """bf16 tanh/fc2 only where the VPU/EUP/MXU are bf16-native (v6e, v7x)."""
    try:
        kind = jax.devices()[0].device_kind.lower()
    except Exception:
        return False
    return not any(g in kind for g in ("v2", "v3", "v4", "v5"))


def pinn_kernel(tb_ref, w1_ref, b1_ref, w2_ref, b2_ref, o_ref):
    """Lane-dense PINN forward for one batch tile.

    tb_ref : (IN_DIM, TILE_N)        f32 input, batch on lanes
    w1_ref : (HIDDEN_PAD, IN_DIM)    f32 fc1 weight, transposed + zero-padded
    b1_ref : (HIDDEN_PAD, 1)         f32
    w2_ref : (OUT_PAD, HIDDEN_PAD)   fc2 weight (f32 or bf16), transposed + padded
    b2_ref : (OUT_PAD, 1)            f32
    o_ref  : (OUT_PAD, TILE_N)       f32 output, batch on lanes
    """
    tb = tb_ref[...]                                   # (IN_DIM, TILE_N) f32
    w1 = w1_ref[...]                                   # (HIDDEN_PAD, IN_DIM) f32

    # fc1: K = IN_DIM = 2 would waste the MXU -> IN_DIM VPU broadcast FMAs.
    acc = b1_ref[...] + w1[:, 0:1] * tb[0:1, :]        # (HIDDEN_PAD, TILE_N)
    for k in range(1, IN_DIM):                         # static, tiny loop
        acc = acc + w1[:, k:k + 1] * tb[k:k + 1, :]

    # tanh on the EUP; compute dtype follows w2 (bf16 on v6e/v7x, f32 on v5e).
    h = jnp.tanh(acc.astype(w2_ref.dtype))             # (HIDDEN_PAD, TILE_N)

    # fc2 on the MXU: (OUT_PAD, HIDDEN_PAD) @ (HIDDEN_PAD, TILE_N), f32 acc.
    out = (
        jnp.dot(w2_ref[...], h, preferred_element_type=jnp.float32)
        + b2_ref[...]                                  # (OUT_PAD, 1) broadcast
    )

    # (1 - exp(-t)) gate; t is row 0 of the input, broadcast over output rows.
    gate = 1.0 - jnp.exp(-tb[0:1, :])                  # (1, TILE_N)
    o_ref[...] = gate * out


def pinn_forward(tb, w1, b1, w2, b2, *, use_bf16=None):
    """PINN forward.

    tb: (N, IN_DIM) f32 (0-d / 1-d inputs are unsqueezed like the PyTorch module).
    Weights in (in_features, out_features) layout:
      w1 (IN_DIM, HIDDEN), b1 (HIDDEN,), w2 (HIDDEN, OUT_DIM), b2 (OUT_DIM,).
    Returns (N, OUT_DIM) f32.
    """
    if use_bf16 is None:
        use_bf16 = _bf16_compute_default()

    tb = jnp.asarray(tb, jnp.float32)
    if tb.ndim == 0:
        tb = tb.reshape(1, 1)
    elif tb.ndim == 1:
        tb = tb[:, None]
    if tb.shape[1] != IN_DIM:
        raise ValueError(
            f"PINN expects {IN_DIM} input features, got shape {tb.shape}")
    n = tb.shape[0]

    # ---- parameter plumbing: pad hidden->104, out->8, transpose lane-dense ----
    hpad = HIDDEN_PAD - HIDDEN
    opad = OUT_PAD - OUT_DIM
    w1t = jnp.pad(jnp.asarray(w1, jnp.float32), ((0, 0), (0, hpad))).T      # (104, 2)
    b1t = jnp.pad(jnp.asarray(b1, jnp.float32).reshape(-1),
                  (0, hpad)).reshape(HIDDEN_PAD, 1)                          # (104, 1)
    w2t = jnp.pad(jnp.asarray(w2, jnp.float32), ((0, hpad), (0, opad))).T    # (8, 104)
    b2t = jnp.pad(jnp.asarray(b2, jnp.float32).reshape(-1),
                  (0, opad)).reshape(OUT_PAD, 1)                             # (8, 1)
    if use_bf16:
        w2t = w2t.astype(jnp.bfloat16)   # bf16 fc2 operand (h cast in-kernel)

    # ---- batch tiling: big tiles, but keep >= 2 grid steps for large N (v7x) ----
    tile_n = min(MAX_TILE_N, max(128, _round_up(pl.cdiv(n, 2), 128)))
    num_tiles = pl.cdiv(n, tile_n)
    n_pad = num_tiles * tile_n

    # ---- lane-dense input: batch on lanes, zero-padded to n_pad columns ----
    tb_t = jnp.pad(tb, ((0, n_pad - n), (0, 0))).T                           # (2, n_pad)

    cost = pl.CostEstimate(
        flops=2 * n_pad * (IN_DIM * HIDDEN_PAD + HIDDEN_PAD * OUT_PAD),
        transcendentals=n_pad * (HIDDEN_PAD + 1),
        bytes_accessed=4 * (n_pad * (IN_DIM + OUT_PAD)
                            + HIDDEN_PAD * (IN_DIM + OUT_PAD + 1) + OUT_PAD),
    )

    out_t = pl.pallas_call(
        pinn_kernel,
        out_shape=jax.ShapeDtypeStruct((OUT_PAD, n_pad), jnp.float32),
        grid=(num_tiles,),
        in_specs=[
            pl.BlockSpec((IN_DIM, tile_n), lambda i: (0, i)),          # tb tile
            pl.BlockSpec((HIDDEN_PAD, IN_DIM), lambda i: (0, 0)),      # w1 (resident)
            pl.BlockSpec((HIDDEN_PAD, 1), lambda i: (0, 0)),           # b1 (resident)
            pl.BlockSpec((OUT_PAD, HIDDEN_PAD), lambda i: (0, 0)),     # w2 (resident)
            pl.BlockSpec((OUT_PAD, 1), lambda i: (0, 0)),              # b2 (resident)
        ],
        out_specs=pl.BlockSpec((OUT_PAD, tile_n), lambda i: (0, i)),
        compiler_params=pltpu.CompilerParams(
            dimension_semantics=("parallel",),     # shard batch tiles across TCs (v7x)
            vmem_limit_bytes=32 * 1024 * 1024,     # explicit, safe under v7x's 64 MiB
        ),
        cost_estimate=cost,
    )(tb_t, w1t, b1t, w2t, b2t)

    return out_t.T[:n, :OUT_DIM]                                       # (N, OUT_DIM)


def init_params(key):
    """Deterministic init mimicking nn.Linear's U(-1/sqrt(fan_in), 1/sqrt(fan_in))."""
    k1, k2, k3, k4 = jax.random.split(key, 4)
    lim1 = 1.0 / jnp.sqrt(jnp.float32(IN_DIM))
    lim2 = 1.0 / jnp.sqrt(jnp.float32(HIDDEN))
    w1 = jax.random.uniform(k1, (IN_DIM, HIDDEN), jnp.float32, -lim1, lim1)
    b1 = jax.random.uniform(k2, (HIDDEN,), jnp.float32, -lim1, lim1)
    w2 = jax.random.uniform(k3, (HIDDEN, OUT_DIM), jnp.float32, -lim2, lim2)
    b2 = jax.random.uniform(k4, (OUT_DIM,), jnp.float32, -lim2, lim2)
    return w1, b1, w2, b2


def pinn_reference(tb, w1, b1, w2, b2):
    t = tb[:, 0:1]
    h = jnp.tanh(tb @ w1 + b1[None, :])
    out = h @ w2 + b2[None, :]
    return (1.0 - jnp.exp(-t)) * out


if __name__ == "__main__":
    key = jax.random.PRNGKey(0)
    k_in, k_params = jax.random.split(key)

    N = 8  # small batch (kernel tiles/pads internally)
    tb = jax.random.normal(k_in, (N, IN_DIM), jnp.float32)
    w1, b1, w2, b2 = init_params(k_params)

    use_bf16 = _bf16_compute_default()
    y = pinn_forward(tb, w1, b1, w2, b2, use_bf16=use_bf16)
    y = jax.block_until_ready(y)

    y_ref = pinn_reference(tb, w1, b1, w2, b2)
    assert y.shape == (N, OUT_DIM)
    tol = 2e-2 if use_bf16 else 1e-4   # bf16 tanh/fc2 path relaxes to ~1e-3 rel
    assert jnp.allclose(y, y_ref, atol=tol, rtol=tol), "mismatch vs reference"

    print("KERNEL_OK")
</pallas_src>

<mosaic_0001>
module attributes {stable_mosaic.version = 11 : i64} {
  func.func @pinn_kernel(%arg0: i32, %arg1: memref<2x128xf32, #tpu.memory_space<vmem>>, %arg2: memref<104x2xf32, #tpu.memory_space<vmem>>, %arg3: memref<104x1xf32, #tpu.memory_space<vmem>>, %arg4: memref<8x104xbf16, #tpu.memory_space<vmem>>, %arg5: memref<8x1xf32, #tpu.memory_space<vmem>>, %arg6: memref<8x128xf32, #tpu.memory_space<vmem>>) attributes {dimension_semantics = [#tpu.dimension_semantics<parallel>], iteration_bounds = array<i64: 1>, scalar_prefetch = 0 : i64, scratch_operands = 0 : i64, tpu.core_type = #tpu.core_type<tc>, window_params = [{transform_indices = @transform_0, window_bounds = array<i64: 2, 128>}, {pipeline_mode = #tpu.pipeline_mode<synchronous>, transform_indices = @transform_1, window_bounds = array<i64: 104, 2>}, {pipeline_mode = #tpu.pipeline_mode<synchronous>, transform_indices = @transform_2, window_bounds = array<i64: 104, 1>}, {pipeline_mode = #tpu.pipeline_mode<synchronous>, transform_indices = @transform_3, window_bounds = array<i64: 8, 104>}, {pipeline_mode = #tpu.pipeline_mode<synchronous>, transform_indices = @transform_4, window_bounds = array<i64: 8, 1>}, {transform_indices = @transform_5, window_bounds = array<i64: 8, 128>}]} {
    %c0 = arith.constant 0 : index
    %c0_0 = arith.constant 0 : index
    %0 = vector.load %arg1[%c0, %c0_0] : memref<2x128xf32, #tpu.memory_space<vmem>>, vector<2x128xf32>
    %c0_1 = arith.constant 0 : index
    %c0_2 = arith.constant 0 : index
    %1 = vector.load %arg2[%c0_1, %c0_2] : memref<104x2xf32, #tpu.memory_space<vmem>>, vector<104x2xf32>
    %c0_3 = arith.constant 0 : index
    %c0_4 = arith.constant 0 : index
    %2 = vector.load %arg3[%c0_3, %c0_4] : memref<104x1xf32, #tpu.memory_space<vmem>>, vector<104x1xf32>
    %3 = vector.extract_strided_slice %1 {offsets = [0, 0], sizes = [104, 1], strides = [1, 1]} : vector<104x2xf32> to vector<104x1xf32>
    %4 = vector.extract_strided_slice %0 {offsets = [0, 0], sizes = [1, 128], strides = [1, 1]} : vector<2x128xf32> to vector<1x128xf32>
    %5 = vector.broadcast %3 : vector<104x1xf32> to vector<104x128xf32>
    %6 = vector.broadcast %4 : vector<1x128xf32> to vector<104x128xf32>
    %7 = arith.mulf %5, %6 : vector<104x128xf32>
    %8 = vector.broadcast %2 : vector<104x1xf32> to vector<104x128xf32>
    %9 = arith.addf %8, %7 : vector<104x128xf32>
    %10 = vector.extract_strided_slice %1 {offsets = [0, 1], sizes = [104, 1], strides = [1, 1]} : vector<104x2xf32> to vector<104x1xf32>
    %11 = vector.extract_strided_slice %0 {offsets = [1, 0], sizes = [1, 128], strides = [1, 1]} : vector<2x128xf32> to vector<1x128xf32>
    %12 = vector.broadcast %10 : vector<104x1xf32> to vector<104x128xf32>
    %13 = vector.broadcast %11 : vector<1x128xf32> to vector<104x128xf32>
    %14 = arith.mulf %12, %13 : vector<104x128xf32>
    %15 = arith.addf %9, %14 : vector<104x128xf32>
    %16 = arith.truncf %15 : vector<104x128xf32> to vector<104x128xbf16>
    %17 = math.tanh %16 : vector<104x128xbf16>
    %c0_5 = arith.constant 0 : index
    %c0_6 = arith.constant 0 : index
    %18 = vector.load %arg4[%c0_5, %c0_6] : memref<8x104xbf16, #tpu.memory_space<vmem>>, vector<8x104xbf16>
    %cst = arith.constant dense<0.000000e+00> : vector<8x128xf32>
    %19 = tpu.matmul %18, %17, %cst {dimension_numbers = #tpu.dot_dimension_numbers<[1], [0], [0], [1], [0, 0, 1, 1], [], []>} : vector<8x104xbf16>, vector<104x128xbf16>, vector<8x128xf32> -> vector<8x128xf32>
    %c0_7 = arith.constant 0 : index
    %c0_8 = arith.constant 0 : index
    %20 = vector.load %arg5[%c0_7, %c0_8] : memref<8x1xf32, #tpu.memory_space<vmem>>, vector<8x1xf32>
    %21 = vector.broadcast %20 : vector<8x1xf32> to vector<8x128xf32>
    %22 = arith.addf %19, %21 : vector<8x128xf32>
    %23 = vector.extract_strided_slice %0 {offsets = [0, 0], sizes = [1, 128], strides = [1, 1]} : vector<2x128xf32> to vector<1x128xf32>
    %cst_9 = arith.constant 0.000000e+00 : f32
    %24 = vector.broadcast %cst_9 : f32 to vector<1x128xf32>
    %25 = arith.subf %24, %23 : vector<1x128xf32>
    %26 = math.exp %25 : vector<1x128xf32>
    %cst_10 = arith.constant 1.000000e+00 : f32
    %27 = vector.broadcast %cst_10 : f32 to vector<1x128xf32>
    %28 = arith.subf %27, %26 : vector<1x128xf32>
    %29 = vector.broadcast %28 : vector<1x128xf32> to vector<8x128xf32>
    %30 = arith.mulf %29, %22 : vector<8x128xf32>
    %c0_11 = arith.constant 0 : index
    %c0_12 = arith.constant 0 : index
    %31 = vector.load %arg6[%c0_11, %c0_12] : memref<8x128xf32, #tpu.memory_space<vmem>>, vector<8x128xf32>
    tpu.vector_store %arg6[%c0_11, %c0_12], %30 {strides = array<i32>} : memref<8x128xf32, #tpu.memory_space<vmem>>, vector<8x128xf32>,
    return
  }
  func.func @transform_0(%arg0: i32) -> (i32, i32) {
    %c0_i32 = arith.constant 0 : i32
    %c0_i32_0 = arith.constant 0 : i32
    return %c0_i32, %arg0 : i32, i32
  }
  func.func @transform_1(%arg0: i32) -> (i32, i32) {
    %c0_i32 = arith.constant 0 : i32
    %c0_i32_0 = arith.constant 0 : i32
    %c0_i32_1 = arith.constant 0 : i32
    return %c0_i32, %c0_i32_0 : i32, i32
  }
  func.func @transform_2(%arg0: i32) -> (i32, i32) {
    %c0_i32 = arith.constant 0 : i32
    %c0_i32_0 = arith.constant 0 : i32
    %c0_i32_1 = arith.constant 0 : i32
    return %c0_i32, %c0_i32_0 : i32, i32
  }
  func.func @transform_3(%arg0: i32) -> (i32, i32) {
    %c0_i32 = arith.constant 0 : i32
    %c0_i32_0 = arith.constant 0 : i32
    %c0_i32_1 = arith.constant 0 : i32
    return %c0_i32, %c0_i32_0 : i32, i32
  }
  func.func @transform_4(%arg0: i32) -> (i32, i32) {
    %c0_i32 = arith.constant 0 : i32
    %c0_i32_0 = arith.constant 0 : i32
    %c0_i32_1 = arith.constant 0 : i32
    return %c0_i32, %c0_i32_0 : i32, i32
  }
  func.func @transform_5(%arg0: i32) -> (i32, i32) {
    %c0_i32 = arith.constant 0 : i32
    %c0_i32_0 = arith.constant 0 : i32
    return %c0_i32, %arg0 : i32, i32
  }
}

</mosaic_0001>

<llo_original>
// kernel: tpu_custom_call.1
$region0: #{tpu_custom_call.1}
  #allocation0 [shape = 'u32[]', space=smem, size = 0x4, offset = 0x4, fixed_abs, tag = 'smem constant byte address 0x4 - core index']
  #allocation1 [shape = 'u32[144,128]{1,0:T(1,128)}', space=vmem, size = 0x12000, scoped, tag = 'internal scratch']
  %s0 = inlined_call_operand.vmem [shape: f32[2,128], index: 0, kind: input, shape index: {}]
  %s1 = inlined_call_operand.vmem [shape: f32[104,2], index: 1, kind: input, shape index: {}]
  %s2 = inlined_call_operand.vmem [shape: f32[104,1], index: 2, kind: input, shape index: {}]
  %s3 = inlined_call_operand.vmem [shape: bf16[8,104], index: 3, kind: input, shape index: {}]
  %s4 = inlined_call_operand.vmem [shape: f32[8,1], index: 4, kind: input, shape index: {}]
  %s5 = inlined_call_operand.hbm [shape: f32[8,128], index: 5, kind: output, shape index: {}]
  %s6 = sld [smem:[#allocation0]]
  $region30: #{tpu_custom_call.1} parent=0
    _
  %s8 = ssub.s32 1, %s6
  %s9 = scalar_select 0, %s8, %s6
  $region1: #{tpu_custom_call.1} parent=0
    #allocation2 [shape = 'u8[4096]{0}', space=vmem, size = 0x1000, scoped, tag = 'output window, operand 0, single buffered']
    #allocation3 [shape = 's32[1]{0}', space=sflag, size = 0x4, scoped, tag = 'scoped memory for tpu_custom_call.1']
    %10 = vsyncpa [#allocation3], 0
    // Predicated region
    $region2: #{tpu_custom_call.1} parent=1 // pred_check
      _
    $region3: #{tpu_custom_call.1} parent=1 // pred_check_branch
      %12 = sbr.rel (0) target = $region5
    $region4: #{tpu_custom_call.1} parent=1 // pred_region
      _
    $region5: #{tpu_custom_call.1} parent=1 // pred_fallthru
      _
    // Predicated region
    $region6: #{tpu_custom_call.1} parent=1 // pred_check
      _
    $region7: #{tpu_custom_call.1} parent=1 // pred_check_branch
      %14 = sbr.rel (0) target = $region9
    $region8: #{tpu_custom_call.1} parent=1 // pred_region
      _
    $region9: #{tpu_custom_call.1} parent=1 // pred_fallthru
      _
    // Predicated region
    $region10: #{tpu_custom_call.1} parent=1 // pred_check
      _
    $region11: #{tpu_custom_call.1} parent=1 // pred_check_branch
      %16 = sbr.rel (0) target = $region13
    $region12: #{tpu_custom_call.1} parent=1 // pred_region
      _
    $region13: #{tpu_custom_call.1} parent=1 // pred_fallthru
      _
    // Predicated region
    $region14: #{tpu_custom_call.1} parent=1 // pred_check
      _
    $region15: #{tpu_custom_call.1} parent=1 // pred_check_branch
      %18 = sbr.rel (0) target = $region17
    $region16: #{tpu_custom_call.1} parent=1 // pred_region
      _
    $region17: #{tpu_custom_call.1} parent=1 // pred_fallthru
      _
    // Predicated region
    $region18: #{tpu_custom_call.1} parent=1 // pred_check
      _
    $region19: #{tpu_custom_call.1} parent=1 // pred_check_branch
      %20 = sbr.rel (0) target = $region21
    $region20: #{tpu_custom_call.1} parent=1 // pred_region
      _
    $region21: #{tpu_custom_call.1} parent=1 // pred_fallthru
      _
    %v22 = vld [vmem:[%s0] sm:$0x3]
    %v23 = vld [vmem:[%s1] sm:$0xff]
    %v24 = vld [vmem:[%s1 + $0x8] sm:$0xff]
    %v25 = vld [vmem:[%s1 + $0x10] sm:$0xff]
    %v26 = vld [vmem:[%s1 + $0x18] sm:$0xff]
    %v27 = vld [vmem:[%s1 + $0x20] sm:$0xff]
    %v28 = vld [vmem:[%s1 + $0x28] sm:$0xff]
    %v29 = vld [vmem:[%s1 + $0x30] sm:$0xff]
    %v30 = vld [vmem:[%s1 + $0x38] sm:$0xff]
    %v31 = vld [vmem:[%s1 + $0x40] sm:$0xff]
    %v32 = vld [vmem:[%s1 + $0x48] sm:$0xff]
    %v33 = vld [vmem:[%s1 + $0x50] sm:$0xff]
    %v34 = vld [vmem:[%s1 + $0x58] sm:$0xff]
    %v35 = vld [vmem:[%s1 + $0x60] sm:$0xff]
    %v36 = vld [vmem:[%s2] sm:$0xff]
    %v37 = vld [vmem:[%s2 + $0x8] sm:$0xff]
    %v38 = vld [vmem:[%s2 + $0x10] sm:$0xff]
    %v39 = vld [vmem:[%s2 + $0x18] sm:$0xff]
    %v40 = vld [vmem:[%s2 + $0x20] sm:$0xff]
    %v41 = vld [vmem:[%s2 + $0x28] sm:$0xff]
    %v42 = vld [vmem:[%s2 + $0x30] sm:$0xff]
    %v43 = vld [vmem:[%s2 + $0x38] sm:$0xff]
    %v44 = vld [vmem:[%s2 + $0x40] sm:$0xff]
    %v45 = vld [vmem:[%s2 + $0x48] sm:$0xff]
    %v46 = vld [vmem:[%s2 + $0x50] sm:$0xff]
    %v47 = vld [vmem:[%s2 + $0x58] sm:$0xff]
    %v48 = vld [vmem:[%s2 + $0x60] sm:$0xff]
    %50 = vset.pattern.permute.xlu0 0
    %51 = vperm.xlu0 %50, %v23
    %v52 = vpop.permute.xlu0 %51
    %55 = vset.pattern.permute.xlu0 0
    %56 = vperm.xlu0 %55, %v24
    %v57 = vpop.permute.xlu0 %56
    %60 = vset.pattern.permute.xlu0 0
    %61 = vperm.xlu0 %60, %v25
    %v62 = vpop.permute.xlu0 %61
    %65 = vset.pattern.permute.xlu0 0
    %66 = vperm.xlu0 %65, %v26
    %v67 = vpop.permute.xlu0 %66
    %70 = vset.pattern.permute.xlu0 0
    %71 = vperm.xlu0 %70, %v27
    %v72 = vpop.permute.xlu0 %71
    %75 = vset.pattern.permute.xlu0 0
    %76 = vperm.xlu0 %75, %v28
    %v77 = vpop.permute.xlu0 %76
    %80 = vset.pattern.permute.xlu0 0
    %81 = vperm.xlu0 %80, %v29
    %v82 = vpop.permute.xlu0 %81
    %85 = vset.pattern.permute.xlu0 0
    %86 = vperm.xlu0 %85, %v30
    %v87 = vpop.permute.xlu0 %86
    %90 = vset.pattern.permute.xlu0 0
    %91 = vperm.xlu0 %90, %v31
    %v92 = vpop.permute.xlu0 %91
    %95 = vset.pattern.permute.xlu0 0
    %96 = vperm.xlu0 %95, %v32
    %v97 = vpop.permute.xlu0 %96
    %100 = vset.pattern.permute.xlu0 0
    %101 = vperm.xlu0 %100, %v33
    %v102 = vpop.permute.xlu0 %101
    %105 = vset.pattern.permute.xlu0 0
    %106 = vperm.xlu0 %105, %v34
    %v107 = vpop.permute.xlu0 %106
    %110 = vset.pattern.permute.xlu0 0
    %111 = vperm.xlu0 %110, %v35
    %v112 = vpop.permute.xlu0 %111
    %v114 = vlaneseq
    %v115 = vshrl.u32 %v114, 7
    %v116 = vsub.s32 0, %v115
    %v117 = vrot.slane %v22, %v116
    %v118 = vmul.f32 %v52, %v117
    %v119 = vmul.f32 %v57, %v117
    %v120 = vmul.f32 %v62, %v117
    %v121 = vmul.f32 %v67, %v117
    %v122 = vmul.f32 %v72, %v117
    %v123 = vmul.f32 %v77, %v117
    %v124 = vmul.f32 %v82, %v117
    %v125 = vmul.f32 %v87, %v117
    %v126 = vmul.f32 %v92, %v117
    %v127 = vmul.f32 %v97, %v117
    %v128 = vmul.f32 %v102, %v117
    %v129 = vmul.f32 %v107, %v117
    %v130 = vmul.f32 %v112, %v117
    %132 = vset.pattern.permute.xlu0 0
    %133 = vperm.xlu0 %132, %v36
    %v134 = vpop.permute.xlu0 %133
    %137 = vset.pattern.permute.xlu0 0
    %138 = vperm.xlu0 %137, %v37
    %v139 = vpop.permute.xlu0 %138
    %142 = vset.pattern.permute.xlu0 0
    %143 = vperm.xlu0 %142, %v38
    %v144 = vpop.permute.xlu0 %143
    %147 = vset.pattern.permute.xlu0 0
    %148 = vperm.xlu0 %147, %v39
    %v149 = vpop.permute.xlu0 %148
    %152 = vset.pattern.permute.xlu0 0
    %153 = vperm.xlu0 %152, %v40
    %v154 = vpop.permute.xlu0 %153
    %157 = vset.pattern.permute.xlu0 0
    %158 = vperm.xlu0 %157, %v41
    %v159 = vpop.permute.xlu0 %158
    %162 = vset.pattern.permute.xlu0 0
    %163 = vperm.xlu0 %162, %v42
    %v164 = vpop.permute.xlu0 %163
    %167 = vset.pattern.permute.xlu0 0
    %168 = vperm.xlu0 %167, %v43
    %v169 = vpop.permute.xlu0 %168
    %172 = vset.pattern.permute.xlu0 0
    %173 = vperm.xlu0 %172, %v44
    %v174 = vpop.permute.xlu0 %173
    %177 = vset.pattern.permute.xlu0 0
    %178 = vperm.xlu0 %177, %v45
    %v179 = vpop.permute.xlu0 %178
    %182 = vset.pattern.permute.xlu0 0
    %183 = vperm.xlu0 %182, %v46
    %v184 = vpop.permute.xlu0 %183
    %187 = vset.pattern.permute.xlu0 0
    %188 = vperm.xlu0 %187, %v47
    %v189 = vpop.permute.xlu0 %188
    %192 = vset.pattern.permute.xlu0 0
    %193 = vperm.xlu0 %192, %v48
    %v194 = vpop.permute.xlu0 %193
    %v196 = vadd.f32 %v134, %v118
    %v197 = vadd.f32 %v139, %v119
    %v198 = vadd.f32 %v144, %v120
    %v199 = vadd.f32 %v149, %v121
    %v200 = vadd.f32 %v154, %v122
    %v201 = vadd.f32 %v159, %v123
    %v202 = vadd.f32 %v164, %v124
    %v203 = vadd.f32 %v169, %v125
    %v204 = vadd.f32 %v174, %v126
    %v205 = vadd.f32 %v179, %v127
    %v206 = vadd.f32 %v184, %v128
    %v207 = vadd.f32 %v189, %v129
    %v208 = vadd.f32 %v194, %v130
    %209 = vset.pattern.permute.xlu0 1
    %210 = vperm.xlu0 %209, %v23
    %v211 = vpop.permute.xlu0 %210
    %213 = vset.pattern.permute.xlu0 1
    %214 = vperm.xlu0 %213, %v24
    %v215 = vpop.permute.xlu0 %214
    %217 = vset.pattern.permute.xlu0 1
    %218 = vperm.xlu0 %217, %v25
    %v219 = vpop.permute.xlu0 %218
    %221 = vset.pattern.permute.xlu0 1
    %222 = vperm.xlu0 %221, %v26
    %v223 = vpop.permute.xlu0 %222
    %225 = vset.pattern.permute.xlu0 1
    %226 = vperm.xlu0 %225, %v27
    %v227 = vpop.permute.xlu0 %226
    %229 = vset.pattern.permute.xlu0 1
    %230 = vperm.xlu0 %229, %v28
    %v231 = vpop.permute.xlu0 %230
    %233 = vset.pattern.permute.xlu0 1
    %234 = vperm.xlu0 %233, %v29
    %v235 = vpop.permute.xlu0 %234
    %237 = vset.pattern.permute.xlu0 1
    %238 = vperm.xlu0 %237, %v30
    %v239 = vpop.permute.xlu0 %238
    %241 = vset.pattern.permute.xlu0 1
    %242 = vperm.xlu0 %241, %v31
    %v243 = vpop.permute.xlu0 %242
    %245 = vset.pattern.permute.xlu0 1
    %246 = vperm.xlu0 %245, %v32
    %v247 = vpop.permute.xlu0 %246
    %249 = vset.pattern.permute.xlu0 1
    %250 = vperm.xlu0 %249, %v33
    %v251 = vpop.permute.xlu0 %250
    %253 = vset.pattern.permute.xlu0 1
    %254 = vperm.xlu0 %253, %v34
    %v255 = vpop.permute.xlu0 %254
    %257 = vset.pattern.permute.xlu0 1
    %258 = vperm.xlu0 %257, %v35
    %v259 = vpop.permute.xlu0 %258
    %v261 = vlaneseq
    %v262 = vshrl.u32 %v261, 7
    %v263 = vsub.s32 1, %v262
    %v264 = vrot.slane %v22, %v263
    %v265 = vmul.f32 %v211, %v264
    %v266 = vmul.f32 %v215, %v264
    %v267 = vmul.f32 %v219, %v264
    %v268 = vmul.f32 %v223, %v264
    %v269 = vmul.f32 %v227, %v264
    %v270 = vmul.f32 %v231, %v264
    %v271 = vmul.f32 %v235, %v264
    %v272 = vmul.f32 %v239, %v264
    %v273 = vmul.f32 %v243, %v264
    %v274 = vmul.f32 %v247, %v264
    %v275 = vmul.f32 %v251, %v264
    %v276 = vmul.f32 %v255, %v264
    %v277 = vmul.f32 %v259, %v264
    %v278 = vadd.f32 %v196, %v265
    %v279 = vadd.f32 %v197, %v266
    %v280 = vadd.f32 %v198, %v267
    %v281 = vadd.f32 %v199, %v268
    %v282 = vadd.f32 %v200, %v269
    %v283 = vadd.f32 %v201, %v270
    %v284 = vadd.f32 %v202, %v271
    %v285 = vadd.f32 %v203, %v272
    %v286 = vadd.f32 %v204, %v273
    %v287 = vadd.f32 %v205, %v274
    %v288 = vadd.f32 %v206, %v275
    %v289 = vadd.f32 %v207, %v276
    %v290 = vadd.f32 %v208, %v277
    %v291 = vpack.c.bf16 %v279, %v278
    %v292 = vpack.c.bf16 %v281, %v280
    %v293 = vpack.c.bf16 %v283, %v282
    %v294 = vpack.c.bf16 %v285, %v284
    %v295 = vpack.c.bf16 %v287, %v286
    %v296 = vpack.c.bf16 %v289, %v288
    %v297 = vpack.c.bf16 %v290, %v290
    %v298 = vtanh.bf16.pop %v291
    %v299 = vtanh.bf16.pop %v292
    %v300 = vtanh.bf16.pop %v293
    %v301 = vtanh.bf16.pop %v294
    %v302 = vtanh.bf16.pop %v295
    %v303 = vtanh.bf16.pop %v296
    %v304 = vtanh.bf16.pop %v297
    %v305 = vld [vmem:[%s3] sm:$0xf]
    %v306 = vld [vmem:[%s4] sm:$0xff]
    %308 = vset.pattern.permute.xlu0 0
    %309 = vperm.xlu0 %308, %v306
    %v310 = vpop.permute.xlu0 %309
    %vm312 = vcmask 850944
    %v314 = vsel %vm312, %v305, 0
    %vm316 = vcmask 1043456
    %v318 = vsel %vm316, %v304, 0
    %320 = vmatprep.subr.bf16.mxu0 0
    %321 = vmatpush1.bf16.msra.mxu0 %v298
    %322 = vmatprep.subr.bf16.mxu0 0
    %323 = vmatpush1.bf16.msra.mxu0 %v299
    %324 = vmatprep.subr.bf16.mxu0 0
    %325 = vmatpush1.bf16.msra.mxu0 %v300
    %326 = vmatprep.subr.bf16.mxu0 0
    %327 = vmatpush1.bf16.msra.mxu0 %v301
    %328 = vmatprep.subr.bf16.mxu0 0
    %329 = vmatpush1.bf16.msra.mxu0 %v302
    %330 = vmatprep.subr.bf16.mxu0 0
    %331 = vmatpush1.bf16.msra.mxu0 %v303
    %332 = vmatprep.subr.bf16.mxu0 0
    %333 = vmatpush1.bf16.msra.mxu0 %v318
    %334 = vmatprep.subr.bf16.mxu0 0
    %335 = vmatpush1.bf16.msra.mxu0 0
    %336 = vmatprep.subr.bf16.mxu0 0
    %337 = vmatpush1.bf16.msra.mxu0 0
    %338 = vmatprep.subr.bf16.mxu0 0
    %339 = vmatpush1.bf16.msra.mxu0 0
    %340 = vmatprep.subr.bf16.mxu0 0
    %341 = vmatpush1.bf16.msra.mxu0 0
    %342 = vmatprep.subr.bf16.mxu0 0
    %343 = vmatpush1.bf16.msra.mxu0 0
    %344 = vmatprep.subr.bf16.mxu0 0
    %345 = vmatpush1.bf16.msra.mxu0 0
    %346 = vmatprep.subr.bf16.mxu0 0
    %347 = vmatpush1.bf16.msra.mxu0 0
    %348 = vmatprep.subr.bf16.mxu0 0
    %349 = vmatpush1.bf16.msra.mxu0 0
    %350 = vmatprep.subr.bf16.mxu0 0
    %351 = vmatpush1.bf16.msra.mxu0 0
    %352 = vmatprep.mubr.bf16.mxu0 0
    %353 = vmatmul.mubr.bf16.gmra.mrb[0].mxu0 %v314
    %v354 = vpop.f32.mrb[0].mxu0
    %v355 = vadd.f32 %v310, %v354
    %v356 = vpop.f32.mrb[0].mxu0
    %v357 = vpop.f32.mrb[0].mxu0
    %v358 = vpop.f32.mrb[0].mxu0
    %359 = vdwg.mxu0
    %v360 = vsub.f32 0.0, %v22
    %v361 = vmul.f32 %v360, 1.442695
    %v362 = vpow.pop %v361
    %v363 = vsub.f32 1.0, %v362
    %v364 = vlaneseq
    %v365 = vshrl.u32 %v364, 7
    %v366 = vsub.s32 0, %v365
    %v367 = vrot.slane %v363, %v366
    %v368 = vmul.f32 %v367, %v355
    %369 = vst [vmem:[#allocation2] sm:$0xff] %v368
    // Predicated region
    $region22: #{tpu_custom_call.1} parent=1 // pred_check
      _
    $region23: #{tpu_custom_call.1} parent=1 // pred_check_branch
      %371 = sbr.rel (0) target = $region25
    $region24: #{tpu_custom_call.1} parent=1 // pred_region
      %s373 = ssub.s32 128, 128
      %374 = vsyncadd [#allocation3], %s373
      %s376 = sshll.u32 [#allocation2], 4
      %s377 = int_to_ptr.vmem [resolvable:$true] %s376
      %379 = dma.vmem_to_hbm [thread:$0]  %s377, 128, %s5, [#allocation3]
    $region25: #{tpu_custom_call.1} parent=1 // pred_fallthru
      _
    // Predicated region
    $region26: #{tpu_custom_call.1} parent=1 // pred_check
      _
    $region27: #{tpu_custom_call.1} parent=1 // pred_check_branch
      %381 = sbr.rel (0) target = $region29
    $region28: #{tpu_custom_call.1} parent=1 // pred_region
      %382 = dma.done [#allocation3], 128
    $region29: #{tpu_custom_call.1} parent=1 // pred_fallthru
      _
    %383 = vsyncpa [#allocation3], 1

</llo_original>
